<compile_context>
chip_gen: v7x
topology: tpu7x:2x2x1
jax: 0.10.0
libtpu: 0.0.40
codegen_flags: <defaults>
</compile_context>

<pallas_src>
import math

import jax
import jax.numpy as jnp
from jax.experimental import pallas as pl
from jax.experimental.pallas import tpu as pltpu


def _round_up(x, m):
    return (x + m - 1) // m * m


# ----------------------------------------------------------------------------
# Pallas kernel: one (TM, Kp) @ (Kp, Dp) tile of the patch projection fused
# with the (positional-embedding + conv-bias) add.  All block dims are
# lane/sublane aligned, so loads/stores are dense.
# ----------------------------------------------------------------------------
def _patch_embed_kernel(p_ref, w_ref, pos_ref, o_ref):
    # p_ref:   (TM, Kp)  patch tile (compute dtype, zero-padded K)
    # w_ref:   (Kp, Dp)  projection matrix (grid-invariant)
    # pos_ref: (TM, Dp)  f32, positional embedding + conv bias (zero-padded D)
    # o_ref:   (TM, Dp)  output tile
    acc = jnp.dot(p_ref[...], w_ref[...], preferred_element_type=jnp.float32)
    o_ref[...] = (acc + pos_ref[...]).astype(o_ref.dtype)


def build_pos_plus_bias(seq_len, hidden, conv_b):
    """Sinusoidal positional table (seq_len, hidden) with the conv bias folded in.

    Interleaving is done with stack+reshape (no strided .at[:, 0::2] scatters).
    Static per (seq_len, hidden, bias) -- callers should compute it once and
    pass it via `audio_deit_embeddings(..., pos_bias=...)`.
    """
    pos = jnp.arange(seq_len, dtype=jnp.float32)[:, None]                  # (S, 1)
    div = jnp.exp(jnp.arange(0, hidden, 2, dtype=jnp.float32)
                  * (-math.log(10000.0) / hidden))                         # (H/2,)
    ang = pos * div                                                        # (S, H/2)
    pe = jnp.stack([jnp.sin(ang), jnp.cos(ang)], axis=-1).reshape(seq_len, hidden)
    return pe + conv_b.astype(jnp.float32)[None, :]


def _audio_deit_embeddings(x, conv_w, conv_b, patch_size, pos_bias=None, *,
                           compute_dtype=jnp.float32, out_dtype=None):
    """Forward pass of AudioDeiTEmbeddings.

    Args:
      x:           (B, 1, H, W) NCHW input.
      conv_w:      (D, 1, P, P) conv weight.
      conv_b:      (D,)         conv bias.
      patch_size:  P (kernel == stride).
      pos_bias:    optional precomputed (nP, D) table = sinusoidal PE + conv_b.
      compute_dtype: matmul input dtype (f32 or bf16; accumulation is f32).
      out_dtype:   output dtype (defaults to x.dtype).
    Returns:
      (embeddings (B, nP, D), num_patch_in_time)
    """
    B, C, H, W = x.shape
    D = conv_w.shape[0]
    P = patch_size
    if out_dtype is None:
        out_dtype = x.dtype
    assert C == 1, "AudioDeiTEmbeddings uses a single-channel patch conv"
    assert H % P == 0 and W % P == 0, "input not divisible by patch size"
    assert D % 2 == 0, "sinusoidal positional encoding requires even hidden size"

    nH, nW = H // P, W // P
    nP = nH * nW
    K = C * P * P
    num_patch_in_time = nH   # == conv output height == emb.size(-2)

    # ---- lane/sublane-aligned tile sizes ------------------------------------
    # Kp/Dp: multiples of 128 (dense MXU feed, unmasked vst); TM: ~256 sequence
    # rows per grid step, multiple of 16.  For real audio shapes (P=16 ->
    # K=256, D=768) the K/D padding is a no-op.
    Kp = _round_up(K, 128)
    Dp = _round_up(D, 128)
    n_seq_tiles = max(1, -(-nP // 256))
    TM = _round_up(-(-nP // n_seq_tiles), 16)
    nP_pad = TM * n_seq_tiles

    # ---- layout glue: im2col repack + cast + pad (one fused XLA pass) -------
    # TODO(synk): fully fusing the im2col repack into the kernel (row-strip
    # BlockSpecs over x) is skipped: the sub-(8,128) in-kernel relayout does
    # not lower cleanly, so the repack stays in XLA fused with the cast/pad.
    patches = x.reshape(B, C, nH, P, nW, P)
    patches = jnp.transpose(patches, (0, 2, 4, 1, 3, 5))     # (B, nH, nW, C, P, P)
    patches = patches.reshape(B, nP, K).astype(compute_dtype)
    patches = jnp.pad(patches, ((0, 0), (0, nP_pad - nP), (0, Kp - K)))

    w_mat = conv_w.reshape(D, K).T.astype(compute_dtype)      # (K, D)
    w_mat = jnp.pad(w_mat, ((0, Kp - K), (0, Dp - D)))

    if pos_bias is None:
        pos_bias = build_pos_plus_bias(nP, D, conv_b)
    pos_bias = jnp.pad(pos_bias.astype(jnp.float32),
                       ((0, nP_pad - nP), (0, Dp - D)))

    # ---- explicit VMEM budget (v5e 16 MiB / v7x 32 MiB scoped defaults) -----
    c_bytes = jnp.dtype(compute_dtype).itemsize
    o_bytes = jnp.dtype(out_dtype).itemsize
    block_bytes = (TM * Kp * c_bytes          # patch tile
                   + Kp * Dp * c_bytes        # weight (grid-invariant)
                   + TM * Dp * 4              # pos+bias tile (f32)
                   + TM * Dp * o_bytes)       # output tile
    vmem_limit = int(min(max(2 * block_bytes + (2 << 20), 32 << 20), 64 << 20))

    out = pl.pallas_call(
        _patch_embed_kernel,
        out_shape=jax.ShapeDtypeStruct((B, nP_pad, Dp), out_dtype),
        grid_spec=pltpu.PrefetchScalarGridSpec(
            num_scalar_prefetch=0,
            grid=(B, n_seq_tiles),
            in_specs=[
                pl.BlockSpec((None, TM, Kp), lambda b, s: (b, s, 0)),
                pl.BlockSpec((Kp, Dp), lambda b, s: (0, 0)),    # grid-invariant
                pl.BlockSpec((TM, Dp), lambda b, s: (s, 0)),
            ],
            out_specs=pl.BlockSpec((None, TM, Dp), lambda b, s: (b, s, 0)),
        ),
        compiler_params=pltpu.CompilerParams(
            dimension_semantics=("parallel", "parallel"),
            vmem_limit_bytes=vmem_limit),
    )(patches, w_mat, pos_bias)

    # Strip alignment padding (identity when nP and D are already aligned).
    emb = out[:, :nP, :D]
    # TODO(synk): training-mode dropout (RNG masking) not implemented; eval only.
    return emb, num_patch_in_time


audio_deit_embeddings = jax.jit(
    _audio_deit_embeddings,
    static_argnums=(3,),                              # patch_size
    static_argnames=("compute_dtype", "out_dtype"))


if __name__ == "__main__":
    # Small shapes consistent with the module: single-channel "audio image",
    # non-overlapping patch projection to hidden dim D.
    B, C, H, W = 2, 1, 16, 16
    P = 4            # patch size (kernel == stride)
    D = 32           # hidden size

    key = jax.random.PRNGKey(0)
    kx, kw, kb = jax.random.split(key, 3)
    x = jax.random.normal(kx, (B, C, H, W), dtype=jnp.float32)
    conv_w = jax.random.normal(kw, (D, C, P, P), dtype=jnp.float32) * 0.02
    conv_b = jax.random.normal(kb, (D,), dtype=jnp.float32) * 0.02

    nP = (H // P) * (W // P)
    # Precompute / cache the (pos-embedding + bias) table outside the hot path.
    pos_bias = build_pos_plus_bias(nP, D, conv_b)

    # --- f32 path -------------------------------------------------------------
    emb, n_time = audio_deit_embeddings(x, conv_w, conv_b, P, pos_bias=pos_bias)
    emb = jax.block_until_ready(emb)

    # Reference (plain JAX, independent of the wrapper's table construction).
    ref_conv = jax.lax.conv_general_dilated(
        x, conv_w, window_strides=(P, P), padding="VALID",
        dimension_numbers=("NCHW", "OIHW", "NCHW"))           # (B, D, nH, nW)
    ref_seq = ref_conv.reshape(B, D, nP).transpose(0, 2, 1)    # (B, nP, D)
    pos = jnp.arange(nP, dtype=jnp.float32)[:, None]
    div = jnp.exp(jnp.arange(0, D, 2, dtype=jnp.float32) * (-math.log(10000.0) / D))
    pe_ref = jnp.zeros((nP, D), jnp.float32)
    pe_ref = pe_ref.at[:, 0::2].set(jnp.sin(pos * div))
    pe_ref = pe_ref.at[:, 1::2].set(jnp.cos(pos * div))
    ref = ref_seq + conv_b[None, None, :] + pe_ref[None]

    assert emb.shape == (B, nP, D)
    assert int(n_time) == H // P
    assert jnp.allclose(emb, ref, atol=1e-4), "f32 mismatch vs reference"

    # --- bf16 compute / bf16 output path (halved HBM traffic) ------------------
    emb_bf, _ = audio_deit_embeddings(
        x, conv_w, conv_b, P, pos_bias=pos_bias,
        compute_dtype=jnp.bfloat16, out_dtype=jnp.bfloat16)
    emb_bf = jax.block_until_ready(emb_bf)
    assert emb_bf.dtype == jnp.bfloat16
    assert jnp.allclose(emb_bf.astype(jnp.float32), ref, atol=5e-2), \
        "bf16 mismatch vs reference"

    print("KERNEL_OK")
</pallas_src>

<mosaic_0001>
module attributes {stable_mosaic.version = 11 : i64} {
  func.func @_patch_embed_kernel(%arg0: i32, %arg1: i32, %arg2: memref<1x16x128xf32, #tpu.memory_space<vmem>>, %arg3: memref<128x128xf32, #tpu.memory_space<vmem>>, %arg4: memref<16x128xf32, #tpu.memory_space<vmem>>, %arg5: memref<1x16x128xf32, #tpu.memory_space<vmem>>) attributes {dimension_semantics = [#tpu.dimension_semantics<parallel>, #tpu.dimension_semantics<parallel>], iteration_bounds = array<i64: 2, 1>, scalar_prefetch = 0 : i64, scratch_operands = 0 : i64, tpu.core_type = #tpu.core_type<tc>, window_params = [{transform_indices = @transform_0, window_bounds = array<i64: 1, 16, 128>}, {pipeline_mode = #tpu.pipeline_mode<synchronous>, transform_indices = @transform_1, window_bounds = array<i64: 128, 128>}, {transform_indices = @transform_2, window_bounds = array<i64: 16, 128>}, {transform_indices = @transform_3, window_bounds = array<i64: 1, 16, 128>}]} {
    %c0 = arith.constant 0 : index
    %c0_0 = arith.constant 0 : index
    %c0_1 = arith.constant 0 : index
    %0 = vector.load %arg2[%c0, %c0_0, %c0_1] : memref<1x16x128xf32, #tpu.memory_space<vmem>>, vector<1x16x128xf32>
    %1 = vector.shape_cast %0 : vector<1x16x128xf32> to vector<16x128xf32>
    %c0_2 = arith.constant 0 : index
    %c0_3 = arith.constant 0 : index
    %2 = vector.load %arg3[%c0_2, %c0_3] : memref<128x128xf32, #tpu.memory_space<vmem>>, vector<128x128xf32>
    %cst = arith.constant dense<0.000000e+00> : vector<16x128xf32>
    %3 = tpu.matmul %1, %2, %cst {dimension_numbers = #tpu.dot_dimension_numbers<[1], [0], [0], [1], [0, 0, 1, 1], [], []>} : vector<16x128xf32>, vector<128x128xf32>, vector<16x128xf32> -> vector<16x128xf32>
    %c0_4 = arith.constant 0 : index
    %c0_5 = arith.constant 0 : index
    %4 = vector.load %arg4[%c0_4, %c0_5] : memref<16x128xf32, #tpu.memory_space<vmem>>, vector<16x128xf32>
    %5 = arith.addf %3, %4 : vector<16x128xf32>
    %c0_6 = arith.constant 0 : index
    %c0_7 = arith.constant 0 : index
    %c0_8 = arith.constant 0 : index
    %6 = vector.load %arg5[%c0_6, %c0_7, %c0_8] : memref<1x16x128xf32, #tpu.memory_space<vmem>>, vector<1x16x128xf32>
    %7 = vector.shape_cast %6 : vector<1x16x128xf32> to vector<16x128xf32>
    %8 = vector.shape_cast %5 : vector<16x128xf32> to vector<1x16x128xf32>
    tpu.vector_store %arg5[%c0_6, %c0_7, %c0_8], %8 {strides = array<i32>} : memref<1x16x128xf32, #tpu.memory_space<vmem>>, vector<1x16x128xf32>,
    return
  }
  func.func @transform_0(%arg0: i32, %arg1: i32) -> (i32, i32, i32) {
    %c0_i32 = arith.constant 0 : i32
    %c0_i32_0 = arith.constant 0 : i32
    return %arg0, %arg1, %c0_i32 : i32, i32, i32
  }
  func.func @transform_1(%arg0: i32, %arg1: i32) -> (i32, i32) {
    %c0_i32 = arith.constant 0 : i32
    %c0_i32_0 = arith.constant 0 : i32
    %c0_i32_1 = arith.constant 0 : i32
    return %c0_i32, %c0_i32_0 : i32, i32
  }
  func.func @transform_2(%arg0: i32, %arg1: i32) -> (i32, i32) {
    %c0_i32 = arith.constant 0 : i32
    %c0_i32_0 = arith.constant 0 : i32
    return %arg1, %c0_i32 : i32, i32
  }
  func.func @transform_3(%arg0: i32, %arg1: i32) -> (i32, i32, i32) {
    %c0_i32 = arith.constant 0 : i32
    %c0_i32_0 = arith.constant 0 : i32
    return %arg0, %arg1, %c0_i32 : i32, i32, i32
  }
}

</mosaic_0001>

<llo_original>
// kernel: _audio_deit_embeddings.1
$region0: #{_audio_deit_embeddings.1}
  #allocation0 [shape = 'u32[]', space=smem, size = 0x4, offset = 0x4, fixed_abs, tag = 'smem constant byte address 0x4 - core index']
  #allocation1 [shape = 'u32[144,128]{1,0:T(1,128)}', space=vmem, size = 0x12000, scoped, tag = 'internal scratch']
  %s0 = inlined_call_operand.vmem [shape: f32[2,16,128], index: 0, kind: input, shape index: {}]
  %s1 = inlined_call_operand.vmem [shape: f32[128,128], index: 1, kind: input, shape index: {}]
  %s2 = inlined_call_operand.vmem [shape: f32[16,128], index: 2, kind: input, shape index: {}]
  %s3 = inlined_call_operand.hbm [shape: f32[2,16,128], index: 3, kind: output, shape index: {}]
  %s4 = sld [smem:[#allocation0]]
  $region45: #{_audio_deit_embeddings.1} parent=0
    _
  %s6 = ssub.s32 1, %s4
  %s7 = scalar_select 0, %s6, %s4
  $region1: #{_audio_deit_embeddings.1} parent=0
    #allocation2 [shape = 'u8[16384]{0}', space=vmem, size = 0x4000, scoped, tag = 'output window, operand 0']
    #allocation3 [shape = 's32[2]{0}', space=sflag, size = 0x8, scoped, tag = 'scoped memory for _audio_deit_embeddings.1']
    %8 = vsyncpa [#allocation3], 0
    %s9 = scalar_lea.sflag [#allocation3], 1
    %10 = vsyncpa %s9, 0
    loop: start=0, step=1, limit=4
    $region2: #{_audio_deit_embeddings.1} parent=1 // loop_pre_header
      _
    $region3: #{_audio_deit_embeddings.1} parent=1 // loop_header
      %s12 = sphi 0, %s16
      %p13 = scmp.ge.s32.totalorder %s12, 4
      %s19 = sphi 0, %s31
      %s20 = sphi 0, %s27
      %s21 = sphi 0, %s19
      %s22 = sphi 0, %s20
      %s23 = sphi 0, %s21
      %s24 = sphi 0, %s22
      %s36 = sphi 0, %s38
      %s39 = sphi 0, %s36
      %s40 = sphi 0, %s39
      %s56 = sphi 0, %s40
      %s60 = sphi 0, %s60
      %s62 = sphi 0, %s60
      %s63 = sphi 0, %s62
      %s77 = sphi 0, %s63
      %s83 = sphi 0, %s85
      %s86 = sphi 0, %s83
      %s87 = sphi 0, %s86
      %s103 = sphi 0, %s87
      %s111 = sphi 0, %s113
      %s114 = sphi 0, %s111
      %s115 = sphi 0, %s114
      %s131 = sphi 0, %s115
    $region4: #{_audio_deit_embeddings.1} parent=1 // loop_header_branch
      %15 = sbr.rel (%p13) target = $region8
    $region5: #{_audio_deit_embeddings.1} parent=1 // loop_body
      %s17 = ssub.s32 %s12, 1
      %s18 = ssub.s32 %s12, 2
      %s25 = sadd.s32 1, %s20
      %p26 = scmp.ge.s32.totalorder %s25, 1
      %s27 = scalar_select %p26, 0, %s25
      %s28 = sadd.s32 1, %s19
      %s29 = scalar_select %p26, %s28, %s19
      %p30 = scmp.ge.s32.totalorder %s29, 2
      %s31 = scalar_select %p30, 0, %s29
      %s32 = ssub.s32 %s19, %s31
      %s33 = ssub.s32 %s20, %s27
      %s34 = sor.u32 %s32, %s33
      %p35 = scmp.eq.s32.totalorder %s34, 0
      %s37 = sadd.s32 %s36, 1
      %s38 = scalar_select %p35, %s36, %s37
      %p41 = pneg %p35
      %p42 = scmp.eq.s32.totalorder %s12, 1
      %p43 = por %p41, %p42
      %p44 = scmp.ne.s32.totalorder %s36, %s39
      %p45 = scmp.eq.s32.totalorder %s12, 0
      %p46 = por %p44, %p45
      %p47 = scmp.ne.s32.totalorder %s36, %s39
      %p48 = scmp.eq.s32.totalorder %s17, 1
      %p49 = por %p47, %p48
      %p50 = scmp.ne.s32.totalorder %s39, %s40
      %p51 = scmp.eq.s32.totalorder %s17, 0
      %p52 = por %p50, %p51
      %p53 = scmp.ne.s32.totalorder %s39, %s40
      %p54 = scmp.eq.s32.totalorder %s18, 1
      %p55 = por %p53, %p54
      %p57 = scmp.ne.s32.totalorder %s40, %s56
      %p58 = scmp.eq.s32.totalorder %s18, 0
      %p59 = por %p57, %p58
      %s61 = sadd.s32 %s60, 1
      %p64 = scmp.eq.s32.totalorder %s12, 1
      %p65 = scmp.ne.s32.totalorder %s60, %s62
      %p66 = scmp.eq.s32.totalorder %s12, 0
      %p67 = por %p65, %p66
      %p68 = scmp.ne.s32.totalorder %s60, %s62
      %p69 = scmp.eq.s32.totalorder %s17, 1
      %p70 = por %p68, %p69
      %p71 = scmp.ne.s32.totalorder %s62, %s63
      %p72 = scmp.eq.s32.totalorder %s17, 0
      %p73 = por %p71, %p72
      %p74 = scmp.ne.s32.totalorder %s62, %s63
      %p75 = scmp.eq.s32.totalorder %s18, 1
      %p76 = por %p74, %p75
      %p78 = scmp.ne.s32.totalorder %s63, %s77
      %p79 = scmp.eq.s32.totalorder %s18, 0
      %p80 = por %p78, %p79
      %s81 = ssub.s32 %s20, %s27
      %p82 = scmp.eq.s32.totalorder %s81, 0
      %s84 = sadd.s32 %s83, 1
      %s85 = scalar_select %p82, %s83, %s84
      %p88 = pneg %p82
      %p89 = scmp.eq.s32.totalorder %s12, 1
      %p90 = por %p88, %p89
      %p91 = scmp.ne.s32.totalorder %s83, %s86
      %p92 = scmp.eq.s32.totalorder %s12, 0
      %p93 = por %p91, %p92
      %p94 = scmp.ne.s32.totalorder %s83, %s86
      %p95 = scmp.eq.s32.totalorder %s17, 1
      %p96 = por %p94, %p95
      %p97 = scmp.ne.s32.totalorder %s86, %s87
      %p98 = scmp.eq.s32.totalorder %s17, 0
      %p99 = por %p97, %p98
      %p100 = scmp.ne.s32.totalorder %s86, %s87
      %p101 = scmp.eq.s32.totalorder %s18, 1
      %p102 = por %p100, %p101
      %p104 = scmp.ne.s32.totalorder %s87, %s103
      %p105 = scmp.eq.s32.totalorder %s18, 0
      %p106 = por %p104, %p105
      %s107 = ssub.s32 %s19, %s31
      %s108 = ssub.s32 %s20, %s27
      %s109 = sor.u32 %s107, %s108
      %p110 = scmp.eq.s32.totalorder %s109, 0
      %s112 = sadd.s32 %s111, 1
      %s113 = scalar_select %p110, %s111, %s112
      %p116 = pneg %p110
      %p117 = scmp.eq.s32.totalorder %s12, 1
      %p118 = por %p116, %p117
      %p119 = scmp.ne.s32.totalorder %s111, %s114
      %p120 = scmp.eq.s32.totalorder %s12, 0
      %p121 = por %p119, %p120
      %p122 = scmp.ne.s32.totalorder %s111, %s114
      %p123 = scmp.eq.s32.totalorder %s17, 1
      %p124 = por %p122, %p123
      %p125 = scmp.ne.s32.totalorder %s114, %s115
      %p126 = scmp.eq.s32.totalorder %s17, 0
      %p127 = por %p125, %p126
      %p128 = scmp.ne.s32.totalorder %s114, %s115
      %p129 = scmp.eq.s32.totalorder %s18, 1
      %p130 = por %p128, %p129
      %p132 = scmp.ne.s32.totalorder %s115, %s131
      %p133 = scmp.eq.s32.totalorder %s18, 0
      %p134 = por %p132, %p133
      %p135 = scmp.le.s32.totalorder 1, %s12
      %p136 = scmp.lt.s32.totalorder %s12, 3
      %p137 = pnand %p135, %p136
      %p138 = pneg %p137
      // Predicated region
      $region9: #{_audio_deit_embeddings.1} parent=5 // pred_check
        _
      $region10: #{_audio_deit_embeddings.1} parent=5 // pred_check_branch
        %140 = sbr.rel (%p137) target = $region12
      $region11: #{_audio_deit_embeddings.1} parent=5 // pred_region
        %s141 = ssub.s32 %s12, 1
        // Predicated region
        $region13: #{_audio_deit_embeddings.1} parent=11 // pred_check
          %p142 = pneg %p73
        $region14: #{_audio_deit_embeddings.1} parent=11 // pred_check_branch
          %144 = sbr.rel (%p142) target = $region16
        $region15: #{_audio_deit_embeddings.1} parent=11 // pred_region
          _
        $region16: #{_audio_deit_embeddings.1} parent=11 // pred_fallthru
          _
        // Predicated region
        $region17: #{_audio_deit_embeddings.1} parent=11 // pred_check
          %p145 = pneg %p99
        $region18: #{_audio_deit_embeddings.1} parent=11 // pred_check_branch
          %147 = sbr.rel (%p145) target = $region20
        $region19: #{_audio_deit_embeddings.1} parent=11 // pred_region
          %s148 = smul.u32 2, %s22
          %p149 = scmp.lt.s32.totalorder %s148, 1
          %s150 = scalar_select %p149, %s148, 1
          %s151 = smul.addr %s150, 8
          %s152 = scalar_lea.vmem %s2, %s151
          %s153 = smul.u32 2, %s22
        $region20: #{_audio_deit_embeddings.1} parent=11 // pred_fallthru
          _
      $region12: #{_audio_deit_embeddings.1} parent=5 // pred_fallthru
        _
      %p154 = scmp.lt.s32.totalorder %s12, 2
      // Predicated region
      $region21: #{_audio_deit_embeddings.1} parent=5 // pred_check
        %p155 = pneg %p154
      $region22: #{_audio_deit_embeddings.1} parent=5 // pred_check_branch
        %157 = sbr.rel (%p155) target = $region24
      $region23: #{_audio_deit_embeddings.1} parent=5 // pred_region
        // Predicated region
        $region25: #{_audio_deit_embeddings.1} parent=23 // pred_check
          %p158 = pneg %p46
        $region26: #{_audio_deit_embeddings.1} parent=23 // pred_check_branch
          %160 = sbr.rel (%p158) target = $region28
        $region27: #{_audio_deit_embeddings.1} parent=23 // pred_region
          %s161 = smul.u32 2, %s20
          %p162 = scmp.lt.s32.totalorder %s19, 1
          %s163 = scalar_select %p162, %s19, 1
          %p164 = scmp.lt.s32.totalorder %s161, 1
          %s165 = scalar_select %p164, %s161, 1
          %s166 = smul.addr %s163, 2
          %s167 = sadd.s32 %s165, %s166
          %s168 = smul.addr %s167, 8
          %s169 = scalar_lea.vmem %s0, %s168
          %s170 = smul.u32 2, %s20
        $region28: #{_audio_deit_embeddings.1} parent=23 // pred_fallthru
          _
      $region24: #{_audio_deit_embeddings.1} parent=5 // pred_fallthru
        _
      %p171 = scmp.le.s32.totalorder 1, %s12
      %p172 = scmp.lt.s32.totalorder %s12, 3
      %p173 = pnand %p171, %p172
      %p174 = pneg %p173
      // Predicated region
      $region29: #{_audio_deit_embeddings.1} parent=5 // pred_check
        _
      $region30: #{_audio_deit_embeddings.1} parent=5 // pred_check_branch
        %176 = sbr.rel (%p173) target = $region32
      $region31: #{_audio_deit_embeddings.1} parent=5 // pred_region
        %s177 = ssub.s32 %s12, 1
        %s178 = smul.u32 2, %s22
        %p179 = scmp.lt.s32.totalorder %s21, 1
        %s180 = scalar_select %p179, %s21, 1
        %p181 = scmp.lt.s32.totalorder %s178, 1
        %s182 = scalar_select %p181, %s178, 1
        %s183 = smul.addr %s180, 2
        %s184 = sadd.s32 %s182, %s183
        %s185 = smul.addr %s184, 8
        %s186 = scalar_lea.vmem %s0, %s185
        %p187 = pneg %p52
        %p188 = pneg %p49
        %p189 = pneg %p73
        %p190 = pneg %p70
        %s191 = smul.u32 2, %s22
        %p192 = scmp.lt.s32.totalorder %s191, 1
        %s193 = scalar_select %p192, %s191, 1
        %s194 = smul.addr %s193, 8
        %s195 = scalar_lea.vmem %s2, %s194
        %p196 = pneg %p99
        %p197 = pneg %p96
        %p198 = pneg %p127
        %p199 = pneg %p124
        %s200 = sand.u32 %s114, 1
        %s201 = scalar_lea.sflag [#allocation3], %s200
        %s202 = sand.u32 %s114, 1
        %s203 = smul.addr %s202, 16
        %s204 = scalar_lea.vmem [#allocation2], %s203
        %s205 = smul.u32 2, %s22
        %p206 = scmp.lt.s32.totalorder %s21, 1
        %s207 = scalar_select %p206, %s21, 1
        %p208 = scmp.lt.s32.totalorder %s205, 1
        %s209 = scalar_select %p208, %s205, 1
        %s210 = smul.addr %s207, 2
        %s211 = sadd.s32 %s209, %s210
        %s212 = smul.addr %s211, 8
        %s213 = scalar_lea.vmem %s0, %s212
        %s214 = smul.u32 2, %s22
        %s215 = smul.u32 2, %s22
        %p216 = scmp.lt.s32.totalorder %s215, 1
        %s217 = scalar_select %p216, %s215, 1
        %s218 = smul.addr %s217, 8
        %s219 = scalar_lea.vmem %s2, %s218
        %s220 = smul.u32 2, %s22
        %s221 = smul.u32 2, %s22
        %v222 = vld [vmem:[%s213] sm:$0xff]
        %v223 = vld [vmem:[%s213 + $0x8] sm:$0xff]
        %v224 = vld [vmem:[%s1] sm:$0xff]
        %v225 = vld [vmem:[%s1 + $0x8] sm:$0xff]
        %v226 = vld [vmem:[%s1 + $0x10] sm:$0xff]
        %v227 = vld [vmem:[%s1 + $0x18] sm:$0xff]
        %v228 = vld [vmem:[%s1 + $0x20] sm:$0xff]
        %v229 = vld [vmem:[%s1 + $0x28] sm:$0xff]
        %v230 = vld [vmem:[%s1 + $0x30] sm:$0xff]
        %v231 = vld [vmem:[%s1 + $0x38] sm:$0xff]
        %v232 = vld [vmem:[%s1 + $0x40] sm:$0xff]
        %v233 = vld [vmem:[%s1 + $0x48] sm:$0xff]
        %v234 = vld [vmem:[%s1 + $0x50] sm:$0xff]
        %v235 = vld [vmem:[%s1 + $0x58] sm:$0xff]
        %v236 = vld [vmem:[%s1 + $0x60] sm:$0xff]
        %v237 = vld [vmem:[%s1 + $0x68] sm:$0xff]
        %v238 = vld [vmem:[%s1 + $0x70] sm:$0xff]
        %v239 = vld [vmem:[%s1 + $0x78] sm:$0xff]
        %v240 = vld [vmem:[%s219] sm:$0xff]
        %v241 = vld [vmem:[%s219 + $0x8] sm:$0xff]
        %242 = vmatprep.subr.mxu0 0.0
        %243 = vmatpush1.msra.mxu0 %v224
        %244 = vmatprep.subr.mxu0 0.0
        %245 = vmatpush1.msra.mxu0 %v225
        %246 = vmatprep.subr.mxu0 0.0
        %247 = vmatpush1.msra.mxu0 %v226
        %248 = vmatprep.subr.mxu0 0.0
        %249 = vmatpush1.msra.mxu0 %v227
        %250 = vmatprep.subr.mxu0 0.0
        %251 = vmatpush1.msra.mxu0 %v228
        %252 = vmatprep.subr.mxu0 0.0
        %253 = vmatpush1.msra.mxu0 %v229
        %254 = vmatprep.subr.mxu0 0.0
        %255 = vmatpush1.msra.mxu0 %v230
        %256 = vmatprep.subr.mxu0 0.0
        %257 = vmatpush1.msra.mxu0 %v231
        %258 = vmatprep.subr.mxu0 0.0
        %259 = vmatpush1.msra.mxu0 %v232
        %260 = vmatprep.subr.mxu0 0.0
        %261 = vmatpush1.msra.mxu0 %v233
        %262 = vmatprep.subr.mxu0 0.0
        %263 = vmatpush1.msra.mxu0 %v234
        %264 = vmatprep.subr.mxu0 0.0
        %265 = vmatpush1.msra.mxu0 %v235
        %266 = vmatprep.subr.mxu0 0.0
        %267 = vmatpush1.msra.mxu0 %v236
        %268 = vmatprep.subr.mxu0 0.0
        %269 = vmatpush1.msra.mxu0 %v237
        %270 = vmatprep.subr.mxu0 0.0
        %271 = vmatpush1.msra.mxu0 %v238
        %272 = vmatprep.subr.mxu0 0.0
        %273 = vmatpush1.msra.mxu0 %v239
        %274 = vmatprep.subr.mxu0 0.0
        %275 = vmatpush1.msra.mxu0 0.0
        %276 = vmatprep.subr.mxu0 0.0
        %277 = vmatpush1.msra.mxu0 0.0
        %278 = vmatprep.subr.mxu0 0.0
        %279 = vmatpush1.msra.mxu0 0.0
        %280 = vmatprep.subr.mxu0 0.0
        %281 = vmatpush1.msra.mxu0 0.0
        %282 = vmatprep.subr.mxu0 0.0
        %283 = vmatpush1.msra.mxu0 0.0
        %284 = vmatprep.subr.mxu0 0.0
        %285 = vmatpush1.msra.mxu0 0.0
        %286 = vmatprep.subr.mxu0 0.0
        %287 = vmatpush1.msra.mxu0 0.0
        %288 = vmatprep.subr.mxu0 0.0
        %289 = vmatpush1.msra.mxu0 0.0
        %290 = vmatprep.subr.mxu0 0.0
        %291 = vmatpush1.msra.mxu0 0.0
        %292 = vmatprep.subr.mxu0 0.0
        %293 = vmatpush1.msra.mxu0 0.0
        %294 = vmatprep.subr.mxu0 0.0
        %295 = vmatpush1.msra.mxu0 0.0
        %296 = vmatprep.subr.mxu0 0.0
        %297 = vmatpush1.msra.mxu0 0.0
        %298 = vmatprep.subr.mxu0 0.0
        %299 = vmatpush1.msra.mxu0 0.0
        %300 = vmatprep.subr.mxu0 0.0
        %301 = vmatpush1.msra.mxu0 0.0
        %302 = vmatprep.subr.mxu0 0.0
        %303 = vmatpush1.msra.mxu0 0.0
        %304 = vmatprep.subr.mxu0 0.0
        %305 = vmatpush1.msra.mxu0 0.0
        %306 = vmatprep.mubr.f32.mxu0 0.0
        %307 = vmatmul.mubr.f32.gmra.mrb[0].mxu0 %v222
        %v308 = vpop.f32.mrb[0].mxu0
        %v309 = vadd.f32 %v240, %v308
        %v310 = vpop.f32.mrb[0].mxu0
        %311 = vmatprep.mubr.f32.mxu0 0.0
        %312 = vmatmul.mubr.f32.gmra.mrb[0].mxu0 %v223
        %v313 = vpop.f32.mrb[0].mxu0
        %v314 = vadd.f32 %v241, %v313
        %v315 = vpop.f32.mrb[0].mxu0
        %316 = vdwg.mxu0
        %317 = vst [vmem:[%s204] sm:$0xff] %v309
        %318 = vst [vmem:[%s204 + $0x8] sm:$0xff] %v314
        %s319 = sand.u32 %s114, 1
        %s320 = scalar_lea.sflag [#allocation3], %s319
        %s321 = sand.u32 %s114, 1
        %s322 = smul.addr %s321, 16
        %s323 = scalar_lea.vmem [#allocation2], %s322
        // Predicated region
        $region33: #{_audio_deit_embeddings.1} parent=31 // pred_check
          %p324 = pneg %p124
        $region34: #{_audio_deit_embeddings.1} parent=31 // pred_check_branch
          %326 = sbr.rel (%p324) target = $region36
        $region35: #{_audio_deit_embeddings.1} parent=31 // pred_region
          %s327 = smul.u32 2, %s22
          %s329 = ssub.s32 256, 256
          %330 = vsyncadd %s320, %s329
          %s331 = smul.addr %s21, 2
          %s332 = sadd.s32 %s327, %s331
          %s333 = smul.addr %s332, 128
          %s334 = scalar_lea.hbm %s3, %s333
          %s335 = sshll.u32 %s323, 4
          %s336 = int_to_ptr.vmem [resolvable:$true] %s335
          %341 = dma.vmem_to_hbm [thread:$0]  %s336, 256, %s334, %s320, 128, 128, 8
        $region36: #{_audio_deit_embeddings.1} parent=31 // pred_fallthru
          _
      $region32: #{_audio_deit_embeddings.1} parent=5 // pred_fallthru
        _
      %p342 = scmp.le.s32.totalorder 2, %s12
      // Predicated region
      $region37: #{_audio_deit_embeddings.1} parent=5 // pred_check
        %p343 = pneg %p342
      $region38: #{_audio_deit_embeddings.1} parent=5 // pred_check_branch
        %345 = sbr.rel (%p343) target = $region40
      $region39: #{_audio_deit_embeddings.1} parent=5 // pred_region
        %s346 = ssub.s32 %s12, 2
        // Predicated region
        $region41: #{_audio_deit_embeddings.1} parent=39 // pred_check
          %p347 = pneg %p130
        $region42: #{_audio_deit_embeddings.1} parent=39 // pred_check_branch
          %349 = sbr.rel (%p347) target = $region44
        $region43: #{_audio_deit_embeddings.1} parent=39 // pred_region
          %s350 = sand.u32 %s115, 1
          %s351 = scalar_lea.sflag [#allocation3], %s350
          %s352 = sand.u32 %s115, 1
          %s353 = smul.addr %s352, 16
          %s354 = scalar_lea.vmem [#allocation2], %s353
          %355 = dma.done %s351, 256
        $region44: #{_audio_deit_embeddings.1} parent=39 // pred_fallthru
          _
      $region40: #{_audio_deit_embeddings.1} parent=5 // pred_fallthru
        _
    $region6: #{_audio_deit_embeddings.1} parent=1 // loop_footer
      %s16 = sadd.s32 1, %s12
    $region7: #{_audio_deit_embeddings.1} parent=1 // loop_footer_branch
      %11 = sbr.rel target = $region3
    $region8: #{_audio_deit_embeddings.1} parent=1 // loop_exit
      _
    %356 = vsyncpa [#allocation3], 1
    %s357 = scalar_lea.sflag [#allocation3], 1
    %358 = vsyncpa %s357, 1

</llo_original>
